<compile_context>
chip_gen: v5e
topology: v5e:2x2
jax: 0.10.0
libtpu: 0.0.40
codegen_flags: <defaults>
</compile_context>

<pallas_src>
import jax
import jax.numpy as jnp
from jax import lax
from jax.experimental import pallas as pl
from jax.experimental.pallas import tpu as pltpu

INPUT_SIZE = 28
HIDDEN = 64
NUM_CLASSES = 10
OUT_PAD = 128          # lane-dense classifier width (zeros past NUM_CLASSES)


def lstm_kernel(x_ref, wih_ref, whh_ref, b_ref, wout_ref, bout_ref,
                out_ref, xw_ref):
    # x_ref: (T, B, I) time-major, batch already padded to a multiple of 8.
    T, B, I = x_ref.shape
    H = HIDDEN
    G = 4 * H

    # Hoisted time-parallel input projection + bias: one matmul for all steps,
    # stored straight into VMEM scratch so it does not pin vregs across the
    # recurrence.  (T, B, I) -> (T*B, I) is a leading-dim collapse (free).
    xw_ref[...] = (jnp.dot(x_ref[...].reshape(T * B, I), wih_ref[...],
                           preferred_element_type=jnp.float32)
                   + b_ref[...]).reshape(T, B, G)

    whh = whh_ref[...]                       # (H, 4H) bf16, resident (8 vregs)

    def step(t, carry):
        h, c = carry
        # xw_ref[t]: 2-vreg VMEM load, hidden under the MXU latency.
        # bf16 x bf16 recurrent matmul, f32 accumulation: one MXU push/step.
        gates = xw_ref[t] + jnp.dot(h.astype(jnp.bfloat16), whh,
                                    preferred_element_type=jnp.float32)
        # Full-vreg activations on the EUP; slice only for the combine.
        sig = jax.nn.sigmoid(gates)          # i | f | . | o
        tnh = jnp.tanh(gates)                # . | . | g | .
        i_g = sig[:, 0 * H:1 * H]
        f_g = sig[:, 1 * H:2 * H]
        g_g = tnh[:, 2 * H:3 * H]
        o_g = sig[:, 3 * H:4 * H]
        c = f_g * c + i_g * g_g
        h = o_g * jnp.tanh(c)
        return (h, c)

    h0 = jnp.zeros((B, H), jnp.float32)
    c0 = jnp.zeros((B, H), jnp.float32)
    h, _ = lax.fori_loop(0, T, step, (h0, c0), unroll=True)

    # Final Linear(64 -> 10), padded to 128 lanes -> unmasked store.
    out_ref[...] = (jnp.dot(h, wout_ref[...], preferred_element_type=jnp.float32)
                    + bout_ref[...]).astype(out_ref.dtype)


def prepare_params(params):
    """One-time weight prep (transpose / bias fold / bf16 cast / lane pad)."""
    wout_pad = jnp.zeros((HIDDEN, OUT_PAD), jnp.float32)
    wout_pad = wout_pad.at[:, :NUM_CLASSES].set(params["w_out"].T)
    bout_pad = jnp.zeros((1, OUT_PAD), jnp.float32)
    bout_pad = bout_pad.at[:, :NUM_CLASSES].set(params["b_out"])
    return {
        "wih_t": params["w_ih"].T,                            # (I, 4H) f32
        "whh_t": params["w_hh"].T.astype(jnp.bfloat16),       # (H, 4H) bf16
        "b": (params["b_ih"] + params["b_hh"])[None, :],      # (1, 4H) f32
        "wout_t": wout_pad,                                   # (H, 128) f32
        "bout": bout_pad,                                     # (1, 128) f32
    }


@jax.jit
def rnn_forward(x, prepped):
    """x: (B, T, INPUT_SIZE) float32 (batch_first, like the PyTorch module)."""
    B, T, I = x.shape
    assert I == INPUT_SIZE

    # Time-major + pad batch to a multiple of 8 sublanes (fuses into one copy).
    Bp = ((B + 7) // 8) * 8
    x_tm = jnp.transpose(x, (1, 0, 2))                        # (T, B, I)
    if Bp != B:
        x_tm = jnp.pad(x_tm, ((0, 0), (0, Bp - B), (0, 0)))

    vmem = lambda: pl.BlockSpec(memory_space=pltpu.MemorySpace.VMEM)
    out = pl.pallas_call(
        lstm_kernel,
        out_shape=jax.ShapeDtypeStruct((Bp, OUT_PAD), jnp.float32),
        in_specs=[vmem() for _ in range(6)],
        out_specs=vmem(),
        scratch_shapes=[pltpu.VMEM((T, Bp, 4 * HIDDEN), jnp.float32)],
    )(x_tm, prepped["wih_t"], prepped["whh_t"], prepped["b"],
      prepped["wout_t"], prepped["bout"])
    return out[:B, :NUM_CLASSES]


def rnn_forward_ref(x, params):
    """Pure-JAX f32 reference (lax.scan) matching PyTorch nn.LSTM + Linear."""
    B, T, _ = x.shape
    h0 = jnp.zeros((B, HIDDEN), jnp.float32)
    c0 = jnp.zeros((B, HIDDEN), jnp.float32)
    b = params["b_ih"] + params["b_hh"]

    def step(carry, x_t):
        h, c = carry
        gates = x_t @ params["w_ih"].T + h @ params["w_hh"].T + b
        i_g = jax.nn.sigmoid(gates[:, 0 * HIDDEN:1 * HIDDEN])
        f_g = jax.nn.sigmoid(gates[:, 1 * HIDDEN:2 * HIDDEN])
        g_g = jnp.tanh(gates[:, 2 * HIDDEN:3 * HIDDEN])
        o_g = jax.nn.sigmoid(gates[:, 3 * HIDDEN:4 * HIDDEN])
        c = f_g * c + i_g * g_g
        h = o_g * jnp.tanh(c)
        return (h, c), None

    (h_last, _), _ = jax.lax.scan(step, (h0, c0), jnp.transpose(x, (1, 0, 2)))
    return h_last @ params["w_out"].T + params["b_out"]


def init_params(key):
    # Deterministic init mimicking PyTorch's U(-1/sqrt(H), 1/sqrt(H)).
    k = 1.0 / jnp.sqrt(jnp.float32(HIDDEN))
    ks = jax.random.split(key, 6)
    u = lambda kk, shape: jax.random.uniform(kk, shape, jnp.float32, -k, k)
    return {
        "w_ih": u(ks[0], (4 * HIDDEN, INPUT_SIZE)),
        "w_hh": u(ks[1], (4 * HIDDEN, HIDDEN)),
        "b_ih": u(ks[2], (4 * HIDDEN,)),
        "b_hh": u(ks[3], (4 * HIDDEN,)),
        "w_out": u(ks[4], (NUM_CLASSES, HIDDEN)),
        "b_out": u(ks[5], (NUM_CLASSES,)),
    }


if __name__ == "__main__":
    key = jax.random.PRNGKey(0)
    k_x, k_p = jax.random.split(key)

    B, T = 4, 8
    x = jax.random.normal(k_x, (B, T, INPUT_SIZE), dtype=jnp.float32)
    params = init_params(k_p)
    prepped = prepare_params(params)   # one-time weight prep

    out = jax.block_until_ready(rnn_forward(x, prepped))
    ref = jax.block_until_ready(rnn_forward_ref(x, params))

    assert out.shape == (B, NUM_CLASSES)
    # Tolerance loosened vs the pure-f32 version: the recurrent matmul now uses
    # bf16 operands (f32 accumulation), per the performance feedback.
    assert jnp.allclose(out, ref, atol=2e-2, rtol=2e-2)
    print("KERNEL_OK")
</pallas_src>

<mosaic_0001>
module attributes {stable_mosaic.version = 11 : i64} {
  func.func @lstm_kernel(%arg0: memref<8x8x28xf32, #tpu.memory_space<vmem>>, %arg1: memref<28x256xf32, #tpu.memory_space<vmem>>, %arg2: memref<64x256xbf16, #tpu.memory_space<vmem>>, %arg3: memref<1x256xf32, #tpu.memory_space<vmem>>, %arg4: memref<64x128xf32, #tpu.memory_space<vmem>>, %arg5: memref<1x128xf32, #tpu.memory_space<vmem>>, %arg6: memref<8x128xf32, #tpu.memory_space<vmem>>, %arg7: memref<8x8x256xf32, #tpu.memory_space<vmem>>) attributes {dimension_semantics = [], scalar_prefetch = 0 : i64, scratch_operands = 1 : i64, tpu.core_type = #tpu.core_type<tc>} {
    %c0 = arith.constant 0 : index
    %c0_0 = arith.constant 0 : index
    %c0_1 = arith.constant 0 : index
    %0 = vector.load %arg0[%c0, %c0_0, %c0_1] : memref<8x8x28xf32, #tpu.memory_space<vmem>>, vector<8x8x28xf32>
    %1 = vector.shape_cast %0 : vector<8x8x28xf32> to vector<64x28xf32>
    %c0_2 = arith.constant 0 : index
    %c0_3 = arith.constant 0 : index
    %2 = vector.load %arg1[%c0_2, %c0_3] : memref<28x256xf32, #tpu.memory_space<vmem>>, vector<28x256xf32>
    %cst = arith.constant dense<0.000000e+00> : vector<64x256xf32>
    %3 = tpu.matmul %1, %2, %cst {dimension_numbers = #tpu.dot_dimension_numbers<[1], [0], [0], [1], [0, 0, 1, 1], [], []>} : vector<64x28xf32>, vector<28x256xf32>, vector<64x256xf32> -> vector<64x256xf32>
    %c0_4 = arith.constant 0 : index
    %c0_5 = arith.constant 0 : index
    %4 = vector.load %arg3[%c0_4, %c0_5] : memref<1x256xf32, #tpu.memory_space<vmem>>, vector<1x256xf32>
    %5 = vector.broadcast %4 : vector<1x256xf32> to vector<64x256xf32>
    %6 = arith.addf %3, %5 : vector<64x256xf32>
    %7 = vector.shape_cast %6 : vector<64x256xf32> to vector<8x8x256xf32>
    %c0_6 = arith.constant 0 : index
    %c0_7 = arith.constant 0 : index
    %c0_8 = arith.constant 0 : index
    %8 = vector.load %arg7[%c0_6, %c0_7, %c0_8] : memref<8x8x256xf32, #tpu.memory_space<vmem>>, vector<8x8x256xf32>
    tpu.vector_store %arg7[%c0_6, %c0_7, %c0_8], %7 {strides = array<i32>} : memref<8x8x256xf32, #tpu.memory_space<vmem>>, vector<8x8x256xf32>,
    %c0_9 = arith.constant 0 : index
    %c0_10 = arith.constant 0 : index
    %9 = vector.load %arg2[%c0_9, %c0_10] : memref<64x256xbf16, #tpu.memory_space<vmem>>, vector<64x256xbf16>
    %cst_11 = arith.constant 0.000000e+00 : f32
    %10 = vector.broadcast %cst_11 : f32 to vector<8x64xf32>
    %cst_12 = arith.constant 0.000000e+00 : f32
    %11 = vector.broadcast %cst_12 : f32 to vector<8x64xf32>
    %c0_i32 = arith.constant 0 : i32
    %12 = arith.index_cast %c0_i32 : i32 to index
    %c0_13 = arith.constant 0 : index
    %c0_14 = arith.constant 0 : index
    %13 = vector.load %arg7[%12, %c0_13, %c0_14] : memref<8x8x256xf32, #tpu.memory_space<vmem>>, vector<1x8x256xf32>
    %14 = vector.shape_cast %13 : vector<1x8x256xf32> to vector<8x256xf32>
    %15 = arith.truncf %10 : vector<8x64xf32> to vector<8x64xbf16>
    %cst_15 = arith.constant dense<0.000000e+00> : vector<8x256xf32>
    %16 = tpu.matmul %15, %9, %cst_15 {dimension_numbers = #tpu.dot_dimension_numbers<[1], [0], [0], [1], [0, 0, 1, 1], [], []>} : vector<8x64xbf16>, vector<64x256xbf16>, vector<8x256xf32> -> vector<8x256xf32>
    %17 = arith.addf %14, %16 : vector<8x256xf32>
    %18 = arith.negf %17 : vector<8x256xf32>
    %19 = math.exp %18 : vector<8x256xf32>
    %cst_16 = arith.constant 1.000000e+00 : f32
    %20 = vector.broadcast %cst_16 : f32 to vector<8x256xf32>
    %21 = arith.addf %20, %19 : vector<8x256xf32>
    %22 = arith.divf %20, %21 : vector<8x256xf32>
    %23 = math.tanh %17 : vector<8x256xf32>
    %24 = vector.extract_strided_slice %22 {offsets = [0, 0], sizes = [8, 64], strides = [1, 1]} : vector<8x256xf32> to vector<8x64xf32>
    %25 = vector.extract_strided_slice %22 {offsets = [0, 64], sizes = [8, 64], strides = [1, 1]} : vector<8x256xf32> to vector<8x64xf32>
    %26 = vector.extract_strided_slice %23 {offsets = [0, 128], sizes = [8, 64], strides = [1, 1]} : vector<8x256xf32> to vector<8x64xf32>
    %27 = vector.extract_strided_slice %22 {offsets = [0, 192], sizes = [8, 64], strides = [1, 1]} : vector<8x256xf32> to vector<8x64xf32>
    %28 = arith.mulf %25, %11 : vector<8x64xf32>
    %29 = arith.mulf %24, %26 : vector<8x64xf32>
    %30 = arith.addf %28, %29 : vector<8x64xf32>
    %31 = math.tanh %30 : vector<8x64xf32>
    %32 = arith.mulf %27, %31 : vector<8x64xf32>
    %c1_i32 = arith.constant 1 : i32
    %33 = arith.index_cast %c1_i32 : i32 to index
    %c0_17 = arith.constant 0 : index
    %c0_18 = arith.constant 0 : index
    %34 = vector.load %arg7[%33, %c0_17, %c0_18] : memref<8x8x256xf32, #tpu.memory_space<vmem>>, vector<1x8x256xf32>
    %35 = vector.shape_cast %34 : vector<1x8x256xf32> to vector<8x256xf32>
    %36 = arith.truncf %32 : vector<8x64xf32> to vector<8x64xbf16>
    %cst_19 = arith.constant dense<0.000000e+00> : vector<8x256xf32>
    %37 = tpu.matmul %36, %9, %cst_19 {dimension_numbers = #tpu.dot_dimension_numbers<[1], [0], [0], [1], [0, 0, 1, 1], [], []>} : vector<8x64xbf16>, vector<64x256xbf16>, vector<8x256xf32> -> vector<8x256xf32>
    %38 = arith.addf %35, %37 : vector<8x256xf32>
    %39 = arith.negf %38 : vector<8x256xf32>
    %40 = math.exp %39 : vector<8x256xf32>
    %cst_20 = arith.constant 1.000000e+00 : f32
    %41 = vector.broadcast %cst_20 : f32 to vector<8x256xf32>
    %42 = arith.addf %41, %40 : vector<8x256xf32>
    %43 = arith.divf %41, %42 : vector<8x256xf32>
    %44 = math.tanh %38 : vector<8x256xf32>
    %45 = vector.extract_strided_slice %43 {offsets = [0, 0], sizes = [8, 64], strides = [1, 1]} : vector<8x256xf32> to vector<8x64xf32>
    %46 = vector.extract_strided_slice %43 {offsets = [0, 64], sizes = [8, 64], strides = [1, 1]} : vector<8x256xf32> to vector<8x64xf32>
    %47 = vector.extract_strided_slice %44 {offsets = [0, 128], sizes = [8, 64], strides = [1, 1]} : vector<8x256xf32> to vector<8x64xf32>
    %48 = vector.extract_strided_slice %43 {offsets = [0, 192], sizes = [8, 64], strides = [1, 1]} : vector<8x256xf32> to vector<8x64xf32>
    %49 = arith.mulf %46, %30 : vector<8x64xf32>
    %50 = arith.mulf %45, %47 : vector<8x64xf32>
    %51 = arith.addf %49, %50 : vector<8x64xf32>
    %52 = math.tanh %51 : vector<8x64xf32>
    %53 = arith.mulf %48, %52 : vector<8x64xf32>
    %c2_i32 = arith.constant 2 : i32
    %54 = arith.index_cast %c2_i32 : i32 to index
    %c0_21 = arith.constant 0 : index
    %c0_22 = arith.constant 0 : index
    %55 = vector.load %arg7[%54, %c0_21, %c0_22] : memref<8x8x256xf32, #tpu.memory_space<vmem>>, vector<1x8x256xf32>
    %56 = vector.shape_cast %55 : vector<1x8x256xf32> to vector<8x256xf32>
    %57 = arith.truncf %53 : vector<8x64xf32> to vector<8x64xbf16>
    %cst_23 = arith.constant dense<0.000000e+00> : vector<8x256xf32>
    %58 = tpu.matmul %57, %9, %cst_23 {dimension_numbers = #tpu.dot_dimension_numbers<[1], [0], [0], [1], [0, 0, 1, 1], [], []>} : vector<8x64xbf16>, vector<64x256xbf16>, vector<8x256xf32> -> vector<8x256xf32>
    %59 = arith.addf %56, %58 : vector<8x256xf32>
    %60 = arith.negf %59 : vector<8x256xf32>
    %61 = math.exp %60 : vector<8x256xf32>
    %cst_24 = arith.constant 1.000000e+00 : f32
    %62 = vector.broadcast %cst_24 : f32 to vector<8x256xf32>
    %63 = arith.addf %62, %61 : vector<8x256xf32>
    %64 = arith.divf %62, %63 : vector<8x256xf32>
    %65 = math.tanh %59 : vector<8x256xf32>
    %66 = vector.extract_strided_slice %64 {offsets = [0, 0], sizes = [8, 64], strides = [1, 1]} : vector<8x256xf32> to vector<8x64xf32>
    %67 = vector.extract_strided_slice %64 {offsets = [0, 64], sizes = [8, 64], strides = [1, 1]} : vector<8x256xf32> to vector<8x64xf32>
    %68 = vector.extract_strided_slice %65 {offsets = [0, 128], sizes = [8, 64], strides = [1, 1]} : vector<8x256xf32> to vector<8x64xf32>
    %69 = vector.extract_strided_slice %64 {offsets = [0, 192], sizes = [8, 64], strides = [1, 1]} : vector<8x256xf32> to vector<8x64xf32>
    %70 = arith.mulf %67, %51 : vector<8x64xf32>
    %71 = arith.mulf %66, %68 : vector<8x64xf32>
    %72 = arith.addf %70, %71 : vector<8x64xf32>
    %73 = math.tanh %72 : vector<8x64xf32>
    %74 = arith.mulf %69, %73 : vector<8x64xf32>
    %c3_i32 = arith.constant 3 : i32
    %75 = arith.index_cast %c3_i32 : i32 to index
    %c0_25 = arith.constant 0 : index
    %c0_26 = arith.constant 0 : index
    %76 = vector.load %arg7[%75, %c0_25, %c0_26] : memref<8x8x256xf32, #tpu.memory_space<vmem>>, vector<1x8x256xf32>
    %77 = vector.shape_cast %76 : vector<1x8x256xf32> to vector<8x256xf32>
    %78 = arith.truncf %74 : vector<8x64xf32> to vector<8x64xbf16>
    %cst_27 = arith.constant dense<0.000000e+00> : vector<8x256xf32>
    %79 = tpu.matmul %78, %9, %cst_27 {dimension_numbers = #tpu.dot_dimension_numbers<[1], [0], [0], [1], [0, 0, 1, 1], [], []>} : vector<8x64xbf16>, vector<64x256xbf16>, vector<8x256xf32> -> vector<8x256xf32>
    %80 = arith.addf %77, %79 : vector<8x256xf32>
    %81 = arith.negf %80 : vector<8x256xf32>
    %82 = math.exp %81 : vector<8x256xf32>
    %cst_28 = arith.constant 1.000000e+00 : f32
    %83 = vector.broadcast %cst_28 : f32 to vector<8x256xf32>
    %84 = arith.addf %83, %82 : vector<8x256xf32>
    %85 = arith.divf %83, %84 : vector<8x256xf32>
    %86 = math.tanh %80 : vector<8x256xf32>
    %87 = vector.extract_strided_slice %85 {offsets = [0, 0], sizes = [8, 64], strides = [1, 1]} : vector<8x256xf32> to vector<8x64xf32>
    %88 = vector.extract_strided_slice %85 {offsets = [0, 64], sizes = [8, 64], strides = [1, 1]} : vector<8x256xf32> to vector<8x64xf32>
    %89 = vector.extract_strided_slice %86 {offsets = [0, 128], sizes = [8, 64], strides = [1, 1]} : vector<8x256xf32> to vector<8x64xf32>
    %90 = vector.extract_strided_slice %85 {offsets = [0, 192], sizes = [8, 64], strides = [1, 1]} : vector<8x256xf32> to vector<8x64xf32>
    %91 = arith.mulf %88, %72 : vector<8x64xf32>
    %92 = arith.mulf %87, %89 : vector<8x64xf32>
    %93 = arith.addf %91, %92 : vector<8x64xf32>
    %94 = math.tanh %93 : vector<8x64xf32>
    %95 = arith.mulf %90, %94 : vector<8x64xf32>
    %c4_i32 = arith.constant 4 : i32
    %96 = arith.index_cast %c4_i32 : i32 to index
    %c0_29 = arith.constant 0 : index
    %c0_30 = arith.constant 0 : index
    %97 = vector.load %arg7[%96, %c0_29, %c0_30] : memref<8x8x256xf32, #tpu.memory_space<vmem>>, vector<1x8x256xf32>
    %98 = vector.shape_cast %97 : vector<1x8x256xf32> to vector<8x256xf32>
    %99 = arith.truncf %95 : vector<8x64xf32> to vector<8x64xbf16>
    %cst_31 = arith.constant dense<0.000000e+00> : vector<8x256xf32>
    %100 = tpu.matmul %99, %9, %cst_31 {dimension_numbers = #tpu.dot_dimension_numbers<[1], [0], [0], [1], [0, 0, 1, 1], [], []>} : vector<8x64xbf16>, vector<64x256xbf16>, vector<8x256xf32> -> vector<8x256xf32>
    %101 = arith.addf %98, %100 : vector<8x256xf32>
    %102 = arith.negf %101 : vector<8x256xf32>
    %103 = math.exp %102 : vector<8x256xf32>
    %cst_32 = arith.constant 1.000000e+00 : f32
    %104 = vector.broadcast %cst_32 : f32 to vector<8x256xf32>
    %105 = arith.addf %104, %103 : vector<8x256xf32>
    %106 = arith.divf %104, %105 : vector<8x256xf32>
    %107 = math.tanh %101 : vector<8x256xf32>
    %108 = vector.extract_strided_slice %106 {offsets = [0, 0], sizes = [8, 64], strides = [1, 1]} : vector<8x256xf32> to vector<8x64xf32>
    %109 = vector.extract_strided_slice %106 {offsets = [0, 64], sizes = [8, 64], strides = [1, 1]} : vector<8x256xf32> to vector<8x64xf32>
    %110 = vector.extract_strided_slice %107 {offsets = [0, 128], sizes = [8, 64], strides = [1, 1]} : vector<8x256xf32> to vector<8x64xf32>
    %111 = vector.extract_strided_slice %106 {offsets = [0, 192], sizes = [8, 64], strides = [1, 1]} : vector<8x256xf32> to vector<8x64xf32>
    %112 = arith.mulf %109, %93 : vector<8x64xf32>
    %113 = arith.mulf %108, %110 : vector<8x64xf32>
    %114 = arith.addf %112, %113 : vector<8x64xf32>
    %115 = math.tanh %114 : vector<8x64xf32>
    %116 = arith.mulf %111, %115 : vector<8x64xf32>
    %c5_i32 = arith.constant 5 : i32
    %117 = arith.index_cast %c5_i32 : i32 to index
    %c0_33 = arith.constant 0 : index
    %c0_34 = arith.constant 0 : index
    %118 = vector.load %arg7[%117, %c0_33, %c0_34] : memref<8x8x256xf32, #tpu.memory_space<vmem>>, vector<1x8x256xf32>
    %119 = vector.shape_cast %118 : vector<1x8x256xf32> to vector<8x256xf32>
    %120 = arith.truncf %116 : vector<8x64xf32> to vector<8x64xbf16>
    %cst_35 = arith.constant dense<0.000000e+00> : vector<8x256xf32>
    %121 = tpu.matmul %120, %9, %cst_35 {dimension_numbers = #tpu.dot_dimension_numbers<[1], [0], [0], [1], [0, 0, 1, 1], [], []>} : vector<8x64xbf16>, vector<64x256xbf16>, vector<8x256xf32> -> vector<8x256xf32>
    %122 = arith.addf %119, %121 : vector<8x256xf32>
    %123 = arith.negf %122 : vector<8x256xf32>
    %124 = math.exp %123 : vector<8x256xf32>
    %cst_36 = arith.constant 1.000000e+00 : f32
    %125 = vector.broadcast %cst_36 : f32 to vector<8x256xf32>
    %126 = arith.addf %125, %124 : vector<8x256xf32>
    %127 = arith.divf %125, %126 : vector<8x256xf32>
    %128 = math.tanh %122 : vector<8x256xf32>
    %129 = vector.extract_strided_slice %127 {offsets = [0, 0], sizes = [8, 64], strides = [1, 1]} : vector<8x256xf32> to vector<8x64xf32>
    %130 = vector.extract_strided_slice %127 {offsets = [0, 64], sizes = [8, 64], strides = [1, 1]} : vector<8x256xf32> to vector<8x64xf32>
    %131 = vector.extract_strided_slice %128 {offsets = [0, 128], sizes = [8, 64], strides = [1, 1]} : vector<8x256xf32> to vector<8x64xf32>
    %132 = vector.extract_strided_slice %127 {offsets = [0, 192], sizes = [8, 64], strides = [1, 1]} : vector<8x256xf32> to vector<8x64xf32>
    %133 = arith.mulf %130, %114 : vector<8x64xf32>
    %134 = arith.mulf %129, %131 : vector<8x64xf32>
    %135 = arith.addf %133, %134 : vector<8x64xf32>
    %136 = math.tanh %135 : vector<8x64xf32>
    %137 = arith.mulf %132, %136 : vector<8x64xf32>
    %c6_i32 = arith.constant 6 : i32
    %138 = arith.index_cast %c6_i32 : i32 to index
    %c0_37 = arith.constant 0 : index
    %c0_38 = arith.constant 0 : index
    %139 = vector.load %arg7[%138, %c0_37, %c0_38] : memref<8x8x256xf32, #tpu.memory_space<vmem>>, vector<1x8x256xf32>
    %140 = vector.shape_cast %139 : vector<1x8x256xf32> to vector<8x256xf32>
    %141 = arith.truncf %137 : vector<8x64xf32> to vector<8x64xbf16>
    %cst_39 = arith.constant dense<0.000000e+00> : vector<8x256xf32>
    %142 = tpu.matmul %141, %9, %cst_39 {dimension_numbers = #tpu.dot_dimension_numbers<[1], [0], [0], [1], [0, 0, 1, 1], [], []>} : vector<8x64xbf16>, vector<64x256xbf16>, vector<8x256xf32> -> vector<8x256xf32>
    %143 = arith.addf %140, %142 : vector<8x256xf32>
    %144 = arith.negf %143 : vector<8x256xf32>
    %145 = math.exp %144 : vector<8x256xf32>
    %cst_40 = arith.constant 1.000000e+00 : f32
    %146 = vector.broadcast %cst_40 : f32 to vector<8x256xf32>
    %147 = arith.addf %146, %145 : vector<8x256xf32>
    %148 = arith.divf %146, %147 : vector<8x256xf32>
    %149 = math.tanh %143 : vector<8x256xf32>
    %150 = vector.extract_strided_slice %148 {offsets = [0, 0], sizes = [8, 64], strides = [1, 1]} : vector<8x256xf32> to vector<8x64xf32>
    %151 = vector.extract_strided_slice %148 {offsets = [0, 64], sizes = [8, 64], strides = [1, 1]} : vector<8x256xf32> to vector<8x64xf32>
    %152 = vector.extract_strided_slice %149 {offsets = [0, 128], sizes = [8, 64], strides = [1, 1]} : vector<8x256xf32> to vector<8x64xf32>
    %153 = vector.extract_strided_slice %148 {offsets = [0, 192], sizes = [8, 64], strides = [1, 1]} : vector<8x256xf32> to vector<8x64xf32>
    %154 = arith.mulf %151, %135 : vector<8x64xf32>
    %155 = arith.mulf %150, %152 : vector<8x64xf32>
    %156 = arith.addf %154, %155 : vector<8x64xf32>
    %157 = math.tanh %156 : vector<8x64xf32>
    %158 = arith.mulf %153, %157 : vector<8x64xf32>
    %c7_i32 = arith.constant 7 : i32
    %159 = arith.index_cast %c7_i32 : i32 to index
    %c0_41 = arith.constant 0 : index
    %c0_42 = arith.constant 0 : index
    %160 = vector.load %arg7[%159, %c0_41, %c0_42] : memref<8x8x256xf32, #tpu.memory_space<vmem>>, vector<1x8x256xf32>
    %161 = vector.shape_cast %160 : vector<1x8x256xf32> to vector<8x256xf32>
    %162 = arith.truncf %158 : vector<8x64xf32> to vector<8x64xbf16>
    %cst_43 = arith.constant dense<0.000000e+00> : vector<8x256xf32>
    %163 = tpu.matmul %162, %9, %cst_43 {dimension_numbers = #tpu.dot_dimension_numbers<[1], [0], [0], [1], [0, 0, 1, 1], [], []>} : vector<8x64xbf16>, vector<64x256xbf16>, vector<8x256xf32> -> vector<8x256xf32>
    %164 = arith.addf %161, %163 : vector<8x256xf32>
    %165 = arith.negf %164 : vector<8x256xf32>
    %166 = math.exp %165 : vector<8x256xf32>
    %cst_44 = arith.constant 1.000000e+00 : f32
    %167 = vector.broadcast %cst_44 : f32 to vector<8x256xf32>
    %168 = arith.addf %167, %166 : vector<8x256xf32>
    %169 = arith.divf %167, %168 : vector<8x256xf32>
    %170 = math.tanh %164 : vector<8x256xf32>
    %171 = vector.extract_strided_slice %169 {offsets = [0, 0], sizes = [8, 64], strides = [1, 1]} : vector<8x256xf32> to vector<8x64xf32>
    %172 = vector.extract_strided_slice %169 {offsets = [0, 64], sizes = [8, 64], strides = [1, 1]} : vector<8x256xf32> to vector<8x64xf32>
    %173 = vector.extract_strided_slice %170 {offsets = [0, 128], sizes = [8, 64], strides = [1, 1]} : vector<8x256xf32> to vector<8x64xf32>
    %174 = vector.extract_strided_slice %169 {offsets = [0, 192], sizes = [8, 64], strides = [1, 1]} : vector<8x256xf32> to vector<8x64xf32>
    %175 = arith.mulf %172, %156 : vector<8x64xf32>
    %176 = arith.mulf %171, %173 : vector<8x64xf32>
    %177 = arith.addf %175, %176 : vector<8x64xf32>
    %178 = math.tanh %177 : vector<8x64xf32>
    %179 = arith.mulf %174, %178 : vector<8x64xf32>
    %c8_i32 = arith.constant 8 : i32
    %c0_45 = arith.constant 0 : index
    %c0_46 = arith.constant 0 : index
    %180 = vector.load %arg4[%c0_45, %c0_46] : memref<64x128xf32, #tpu.memory_space<vmem>>, vector<64x128xf32>
    %cst_47 = arith.constant dense<0.000000e+00> : vector<8x128xf32>
    %181 = tpu.matmul %179, %180, %cst_47 {dimension_numbers = #tpu.dot_dimension_numbers<[1], [0], [0], [1], [0, 0, 1, 1], [], []>} : vector<8x64xf32>, vector<64x128xf32>, vector<8x128xf32> -> vector<8x128xf32>
    %c0_48 = arith.constant 0 : index
    %c0_49 = arith.constant 0 : index
    %182 = vector.load %arg5[%c0_48, %c0_49] : memref<1x128xf32, #tpu.memory_space<vmem>>, vector<1x128xf32>
    %183 = vector.broadcast %182 : vector<1x128xf32> to vector<8x128xf32>
    %184 = arith.addf %181, %183 : vector<8x128xf32>
    %c0_50 = arith.constant 0 : index
    %c0_51 = arith.constant 0 : index
    %185 = vector.load %arg6[%c0_50, %c0_51] : memref<8x128xf32, #tpu.memory_space<vmem>>, vector<8x128xf32>
    tpu.vector_store %arg6[%c0_50, %c0_51], %184 {strides = array<i32>} : memref<8x128xf32, #tpu.memory_space<vmem>>, vector<8x128xf32>,
    return
  }
}

</mosaic_0001>

<llo_original>
// kernel: rnn_forward.1
$region0: #{rnn_forward.1}
  #allocation0 [shape = 'u32[]', space=smem, size = 0x4, offset = 0x4, fixed_abs, tag = 'smem constant byte address 0x4 - core index']
  #allocation1 [shape = 'u32[72,128]{1,0:T(1,128)}', space=vmem, size = 0x9000, scoped, tag = 'internal scratch']
  #allocation2 [shape = 'f32[8,8,256]{2,1,0:T(8,128)}', space=vmem, size = 0x10000, scoped, tag = 'scratch operand']
  %s0 = inlined_call_operand.vmem [shape: f32[8,8,28], index: 0, kind: input, shape index: {}]
  %s1 = inlined_call_operand.vmem [shape: f32[28,256], index: 1, kind: input, shape index: {}]
  %s2 = inlined_call_operand.vmem [shape: bf16[64,256], index: 2, kind: input, shape index: {}]
  %s3 = inlined_call_operand.vmem [shape: f32[1,256], index: 3, kind: input, shape index: {}]
  %s4 = inlined_call_operand.hbm [shape: f32[64,128], index: 4, kind: input, shape index: {}]
  %s5 = inlined_call_operand.vmem [shape: f32[1,128], index: 5, kind: input, shape index: {}]
  %s6 = inlined_call_operand.vmem [shape: f32[8,128], index: 6, kind: output, shape index: {}]
  %s7 = sld [smem:[#allocation0]]
  $region38: #{rnn_forward.1} parent=0
    _
  %s9 = ssub.s32 1, %s7
  %s10 = scalar_select 0, %s9, %s7
  $region1: #{rnn_forward.1} parent=0
    #allocation3 [shape = 'u8[32768]{0}', space=vmem, size = 0x8000, scoped, tag = 'input window, operand 4, single buffered']
    #allocation4 [shape = 's32[1]{0}', space=sflag, size = 0x4, scoped, tag = 'scoped memory for rnn_forward.1']
    %11 = vsyncpa [#allocation4], 0
    // Predicated region
    $region2: #{rnn_forward.1} parent=1 // pred_check
      _
    $region3: #{rnn_forward.1} parent=1 // pred_check_branch
      %13 = sbr.rel (0) target = $region5
    $region4: #{rnn_forward.1} parent=1 // pred_region
      _
    $region5: #{rnn_forward.1} parent=1 // pred_fallthru
      _
    // Predicated region
    $region6: #{rnn_forward.1} parent=1 // pred_check
      _
    $region7: #{rnn_forward.1} parent=1 // pred_check_branch
      %15 = sbr.rel (0) target = $region9
    $region8: #{rnn_forward.1} parent=1 // pred_region
      _
    $region9: #{rnn_forward.1} parent=1 // pred_fallthru
      _
    // Predicated region
    $region10: #{rnn_forward.1} parent=1 // pred_check
      _
    $region11: #{rnn_forward.1} parent=1 // pred_check_branch
      %17 = sbr.rel (0) target = $region13
    $region12: #{rnn_forward.1} parent=1 // pred_region
      _
    $region13: #{rnn_forward.1} parent=1 // pred_fallthru
      _
    // Predicated region
    $region14: #{rnn_forward.1} parent=1 // pred_check
      _
    $region15: #{rnn_forward.1} parent=1 // pred_check_branch
      %19 = sbr.rel (0) target = $region17
    $region16: #{rnn_forward.1} parent=1 // pred_region
      _
    $region17: #{rnn_forward.1} parent=1 // pred_fallthru
      _
    // Predicated region
    $region18: #{rnn_forward.1} parent=1 // pred_check
      _
    $region19: #{rnn_forward.1} parent=1 // pred_check_branch
      %21 = sbr.rel (0) target = $region21
    $region20: #{rnn_forward.1} parent=1 // pred_region
      %23 = vsyncadd [#allocation4], 0
      %s24 = sshll.u32 %s4, 4
      %s25 = int_to_ptr.hbm [resolvable:$true] %s24
      %s26 = sshll.u32 [#allocation3], 4
      %s27 = int_to_ptr.vmem [resolvable:$true] %s26
      %32 = dma.hbm_to_vmem [thread:$0]  %s25, 1024, %s27, [#allocation4], 128, 128, 8
    $region21: #{rnn_forward.1} parent=1 // pred_fallthru
      _
    // Predicated region
    $region22: #{rnn_forward.1} parent=1 // pred_check
      _
    $region23: #{rnn_forward.1} parent=1 // pred_check_branch
      %34 = sbr.rel (0) target = $region25
    $region24: #{rnn_forward.1} parent=1 // pred_region
      _
    $region25: #{rnn_forward.1} parent=1 // pred_fallthru
      _
    // Predicated region
    $region26: #{rnn_forward.1} parent=1 // pred_check
      _
    $region27: #{rnn_forward.1} parent=1 // pred_check_branch
      %36 = sbr.rel (0) target = $region29
    $region28: #{rnn_forward.1} parent=1 // pred_region
      %38 = dma.done [#allocation4], 1024
    $region29: #{rnn_forward.1} parent=1 // pred_fallthru
      _
    %v40 = vld [vmem:[%s0] sm:$0xff]
    %v41 = vld [vmem:[%s0 + $0x8] sm:$0xff]
    %v42 = vld [vmem:[%s0 + $0x10] sm:$0xff]
    %v43 = vld [vmem:[%s0 + $0x18] sm:$0xff]
    %v44 = vld [vmem:[%s0 + $0x20] sm:$0xff]
    %v45 = vld [vmem:[%s0 + $0x28] sm:$0xff]
    %v46 = vld [vmem:[%s0 + $0x30] sm:$0xff]
    %v47 = vld [vmem:[%s0 + $0x38] sm:$0xff]
    %v48 = vld [vmem:[%s1] sm:$0xff]
    %v49 = vld [vmem:[%s1 + $0x8] sm:$0xff]
    %v50 = vld [vmem:[%s1 + $0x10] sm:$0xff]
    %v51 = vld [vmem:[%s1 + $0x18] sm:$0xff]
    %v52 = vld [vmem:[%s1 + $0x20] sm:$0xff]
    %v53 = vld [vmem:[%s1 + $0x28] sm:$0xff]
    %v54 = vld [vmem:[%s1 + $0x30] sm:$0xf]
    %v55 = vld [vmem:[%s1 + $0x38] sm:$0xf]
    %v56 = vld [vmem:[%s3] sm:$0x3]
    %v58 = vperm.slane %v56, 0
    %v59 = vperm.slane %v56, 1
    %vm62 = vcmask 228352
    %v64 = vsel %vm62, %v40, 0
    %v67 = vsel %vm62, %v41, 0
    %v70 = vsel %vm62, %v42, 0
    %v73 = vsel %vm62, %v43, 0
    %v76 = vsel %vm62, %v44, 0
    %v79 = vsel %vm62, %v45, 0
    %v82 = vsel %vm62, %v46, 0
    %v85 = vsel %vm62, %v47, 0
    %vm87 = vcmask 1043456
    %v89 = vsel %vm87, %v54, 0
    %v92 = vsel %vm87, %v55, 0
    %94 = vmatpush.msra.mxu0 0.0
    %95 = vmatpush.msra.mxu0 0.0
    %96 = vmatpush.msra.mxu0 0.0
    %97 = vmatpush.msra.mxu0 0.0
    %98 = vmatpush.msra.mxu0 0.0
    %99 = vmatpush.msra.mxu0 0.0
    %100 = vmatpush.msra.mxu0 0.0
    %101 = vmatpush.msra.mxu0 0.0
    %102 = vmatpush.msra.mxu0 0.0
    %103 = vmatpush.msra.mxu0 0.0
    %104 = vmatpush.msra.mxu0 0.0
    %105 = vmatpush.msra.mxu0 0.0
    %106 = vmatpush.msra.mxu0 %v89
    %107 = vmatpush.msra.mxu0 %v52
    %108 = vmatpush.msra.mxu0 %v50
    %109 = vmatpush.msra.mxu0 %v48
    %110 = vmatmul.f32.gmra.mxu0 %v64
    %v111 = vpop.f32.mrf.mxu0
    %v112 = vadd.f32 %v58, %v111
    %113 = vmatmul.f32.gmra.mxu0 %v67
    %v114 = vpop.f32.mrf.mxu0
    %v115 = vadd.f32 %v58, %v114
    %116 = vmatmul.f32.gmra.mxu0 %v70
    %v117 = vpop.f32.mrf.mxu0
    %v118 = vadd.f32 %v58, %v117
    %119 = vmatmul.f32.gmra.mxu0 %v73
    %v120 = vpop.f32.mrf.mxu0
    %v121 = vadd.f32 %v58, %v120
    %122 = vmatmul.f32.gmra.mxu0 %v76
    %v123 = vpop.f32.mrf.mxu0
    %v124 = vadd.f32 %v58, %v123
    %125 = vmatmul.f32.gmra.mxu0 %v79
    %v126 = vpop.f32.mrf.mxu0
    %v127 = vadd.f32 %v58, %v126
    %128 = vmatmul.f32.gmra.mxu0 %v82
    %v129 = vpop.f32.mrf.mxu0
    %v130 = vadd.f32 %v58, %v129
    %131 = vmatmul.f32.gmra.mxu0 %v85
    %v132 = vpop.f32.mrf.mxu0
    %v133 = vadd.f32 %v58, %v132
    %134 = vdwg.mxu0
    %135 = vmatpush.msra.mxu0 0.0
    %136 = vmatpush.msra.mxu0 0.0
    %137 = vmatpush.msra.mxu0 0.0
    %138 = vmatpush.msra.mxu0 0.0
    %139 = vmatpush.msra.mxu0 0.0
    %140 = vmatpush.msra.mxu0 0.0
    %141 = vmatpush.msra.mxu0 0.0
    %142 = vmatpush.msra.mxu0 0.0
    %143 = vmatpush.msra.mxu0 0.0
    %144 = vmatpush.msra.mxu0 0.0
    %145 = vmatpush.msra.mxu0 0.0
    %146 = vmatpush.msra.mxu0 0.0
    %147 = vmatpush.msra.mxu0 %v92
    %148 = vmatpush.msra.mxu0 %v53
    %149 = vmatpush.msra.mxu0 %v51
    %150 = vmatpush.msra.mxu0 %v49
    %151 = vmatmul.f32.gmra.mxu0 %v64
    %v152 = vpop.f32.mrf.mxu0
    %v153 = vadd.f32 %v59, %v152
    %154 = vmatmul.f32.gmra.mxu0 %v67
    %v155 = vpop.f32.mrf.mxu0
    %v156 = vadd.f32 %v59, %v155
    %157 = vmatmul.f32.gmra.mxu0 %v70
    %v158 = vpop.f32.mrf.mxu0
    %v159 = vadd.f32 %v59, %v158
    %160 = vmatmul.f32.gmra.mxu0 %v73
    %v161 = vpop.f32.mrf.mxu0
    %v162 = vadd.f32 %v59, %v161
    %163 = vmatmul.f32.gmra.mxu0 %v76
    %v164 = vpop.f32.mrf.mxu0
    %v165 = vadd.f32 %v59, %v164
    %166 = vmatmul.f32.gmra.mxu0 %v79
    %v167 = vpop.f32.mrf.mxu0
    %v168 = vadd.f32 %v59, %v167
    %169 = vmatmul.f32.gmra.mxu0 %v82
    %v170 = vpop.f32.mrf.mxu0
    %v171 = vadd.f32 %v59, %v170
    %172 = vmatmul.f32.gmra.mxu0 %v85
    %v173 = vpop.f32.mrf.mxu0
    %v174 = vadd.f32 %v59, %v173
    %175 = vdwg.mxu0
    %176 = vst [vmem:[#allocation2] sm:$0xff] %v112
    %177 = vst [vmem:[#allocation2 + $0x8] sm:$0xff] %v153
    %178 = vst [vmem:[#allocation2 + $0x10] sm:$0xff] %v115
    %179 = vst [vmem:[#allocation2 + $0x18] sm:$0xff] %v156
    %180 = vst [vmem:[#allocation2 + $0x20] sm:$0xff] %v118
    %181 = vst [vmem:[#allocation2 + $0x28] sm:$0xff] %v159
    %182 = vst [vmem:[#allocation2 + $0x30] sm:$0xff] %v121
    %183 = vst [vmem:[#allocation2 + $0x38] sm:$0xff] %v162
    %184 = vst [vmem:[#allocation2 + $0x40] sm:$0xff] %v124
    %185 = vst [vmem:[#allocation2 + $0x48] sm:$0xff] %v165
    %186 = vst [vmem:[#allocation2 + $0x50] sm:$0xff] %v127
    %187 = vst [vmem:[#allocation2 + $0x58] sm:$0xff] %v168
    %188 = vst [vmem:[#allocation2 + $0x60] sm:$0xff] %v130
    %189 = vst [vmem:[#allocation2 + $0x68] sm:$0xff] %v171
    %190 = vst [vmem:[#allocation2 + $0x70] sm:$0xff] %v133
    %191 = vst [vmem:[#allocation2 + $0x78] sm:$0xff] %v174
    %v192 = vld [vmem:[%s2] sm:$0xff]
    %v193 = vld [vmem:[%s2 + $0x8] sm:$0xff]
    %v194 = vld [vmem:[%s2 + $0x10] sm:$0xff]
    %v195 = vld [vmem:[%s2 + $0x18] sm:$0xff]
    %v196 = vld [vmem:[%s2 + $0x20] sm:$0xff]
    %v197 = vld [vmem:[%s2 + $0x28] sm:$0xff]
    %v198 = vld [vmem:[%s2 + $0x30] sm:$0xff]
    %v199 = vld [vmem:[%s2 + $0x38] sm:$0xff]
    %v200 = vld [vmem:[#allocation2] sm:$0xff]
    %v201 = vld [vmem:[#allocation2 + $0x8] sm:$0xff]
    %v210 = vunpack.c.l.b16 %v192
    %v211 = vunpack.c.h.b16 %v192
    %v212 = vunpack.c.l.b16 %v193
    %v213 = vunpack.c.h.b16 %v193
    %v214 = vunpack.c.l.b16 %v194
    %v215 = vunpack.c.h.b16 %v194
    %v216 = vunpack.c.l.b16 %v195
    %v217 = vunpack.c.h.b16 %v195
    %v218 = vunpack.c.l.b16 %v196
    %v219 = vunpack.c.h.b16 %v196
    %v220 = vunpack.c.l.b16 %v197
    %v221 = vunpack.c.h.b16 %v197
    %v222 = vunpack.c.l.b16 %v198
    %v223 = vunpack.c.h.b16 %v198
    %v224 = vunpack.c.l.b16 %v199
    %v225 = vunpack.c.h.b16 %v199
    %v226 = vpack.c.b16 %v212, %v210
    %v227 = vpack.c.b16 %v213, %v211
    %v228 = vpack.c.b16 %v216, %v214
    %v229 = vpack.c.b16 %v217, %v215
    %v230 = vpack.c.b16 %v220, %v218
    %v231 = vpack.c.b16 %v221, %v219
    %v232 = vpack.c.b16 %v224, %v222
    %v233 = vpack.c.b16 %v225, %v223
    %vm242 = vcmask 523264
    %v244 = vsel %vm242, 0, 0
    %246 = vmatpush.bf16.msra.mxu0 0
    %247 = vmatpush.bf16.msra.mxu0 0
    %248 = vmatpush.bf16.msra.mxu0 0
    %249 = vmatpush.bf16.msra.mxu0 0
    %250 = vmatpush.bf16.msra.mxu0 %v232
    %251 = vmatpush.bf16.msra.mxu0 %v230
    %252 = vmatpush.bf16.msra.mxu0 %v228
    %253 = vmatpush.bf16.msra.mxu0 %v226
    %254 = vmatmul.bf16.gmra.mxu0 %v244
    %v255 = vpop.f32.mrf.mxu0
    %v256 = vadd.f32 0.0, %v255
    %v257 = vpop.f32.mrf.mxu0
    %258 = vdwg.mxu0
    %259 = vmatpush.bf16.msra.mxu0 0
    %260 = vmatpush.bf16.msra.mxu0 0
    %261 = vmatpush.bf16.msra.mxu0 0
    %262 = vmatpush.bf16.msra.mxu0 0
    %263 = vmatpush.bf16.msra.mxu0 %v233
    %264 = vmatpush.bf16.msra.mxu0 %v231
    %265 = vmatpush.bf16.msra.mxu0 %v229
    %266 = vmatpush.bf16.msra.mxu0 %v227
    %267 = vmatmul.bf16.gmra.mxu0 %v244
    %v268 = vpop.f32.mrf.mxu0
    %v269 = vadd.f32 0.0, %v268
    %v270 = vpop.f32.mrf.mxu0
    %271 = vdwg.mxu0
    %v272 = vadd.f32 %v200, %v256
    %v273 = vadd.f32 %v201, %v269
    %v274 = vxor.u32 %v272, 2147483648
    %v275 = vxor.u32 %v273, 2147483648
    %v276 = vmul.f32 %v274, 1.442695
    %v277 = vpow.pop %v276
    %v278 = vmul.f32 %v275, 1.442695
    %v279 = vpow.pop %v278
    %v280 = vadd.f32 %v277, 1.0
    %v281 = vadd.f32 %v279, 1.0
    %v282 = vrcp.pop %v280
    %v283 = vmul.f32 %v280, %v282
    %v284 = vsub.f32 1.0, %v283
    %v285 = vmul.f32 %v282, %v284
    %v286 = vadd.f32 %v282, %v285
    %vm287 = vweird.f32 %v280
    %vm288 = vweird.f32 %v282
    %vm289 = vmor %vm287, %vm288
    %v290 = vsel %vm289, %v282, %v286
    %v291 = vand.u32 2147483647, %v280
    %vm292 = vcmp.eq.f32.partialorder %v291, 8.507059e+37
    %v293 = vand.u32 %v280, 2147483648
    %v294 = vor.u32 1.1754944e-38, %v293
    %v295 = vsel %vm292, %v294, %v290
    %v296 = vmul.f32 1.0, %v295
    %v297 = vrcp.pop %v281
    %v298 = vmul.f32 %v281, %v297
    %v299 = vsub.f32 1.0, %v298
    %v300 = vmul.f32 %v297, %v299
    %v301 = vadd.f32 %v297, %v300
    %vm302 = vweird.f32 %v281
    %vm303 = vweird.f32 %v297
    %vm304 = vmor %vm302, %vm303
    %v305 = vsel %vm304, %v297, %v301
    %v306 = vand.u32 2147483647, %v281
    %vm307 = vcmp.eq.f32.partialorder %v306, 8.507059e+37
    %v308 = vand.u32 %v281, 2147483648
    %v309 = vor.u32 1.1754944e-38, %v308
    %v310 = vsel %vm307, %v309, %v305
    %v311 = vmul.f32 1.0, %v310
    %v312 = vtanh.pop %v273
    %v313 = vmul.f32 %v296, 0.0
    %v314 = vmul.f32 %v296, %v312
    %316 = vrot.lane.b32.xlu0 %v314, 64
    %v317 = vpop.permute.xlu0 %316
    %v319 = vadd.f32 %v313, %v317
    %v320 = vtanh.pop %v319
    %v321 = vmul.f32 %v311, %v320
    %s322 = scalar_lea.vmem [#allocation2], 16
    %v323 = vld [vmem:[%s322] sm:$0xff]
    %v324 = vld [vmem:[%s322 + $0x8] sm:$0xff]
    %v325 = vpack.c.bf16 %v321, %v321
    %327 = vrot.lane.b32.xlu0 %v325, 64
    %v328 = vpop.permute.xlu0 %327
    %v330 = vsel %vm242, %v328, 0
    %332 = vmatpush.bf16.msra.mxu0 0
    %333 = vmatpush.bf16.msra.mxu0 0
    %334 = vmatpush.bf16.msra.mxu0 0
    %335 = vmatpush.bf16.msra.mxu0 0
    %336 = vmatpush.bf16.msra.mxu0 %v232
    %337 = vmatpush.bf16.msra.mxu0 %v230
    %338 = vmatpush.bf16.msra.mxu0 %v228
    %339 = vmatpush.bf16.msra.mxu0 %v226
    %340 = vmatmul.bf16.gmra.mxu0 %v330
    %v341 = vpop.f32.mrf.mxu0
    %v342 = vadd.f32 0.0, %v341
    %v343 = vpop.f32.mrf.mxu0
    %344 = vdwg.mxu0
    %345 = vmatpush.bf16.msra.mxu0 0
    %346 = vmatpush.bf16.msra.mxu0 0
    %347 = vmatpush.bf16.msra.mxu0 0
    %348 = vmatpush.bf16.msra.mxu0 0
    %349 = vmatpush.bf16.msra.mxu0 %v233
    %350 = vmatpush.bf16.msra.mxu0 %v231
    %351 = vmatpush.bf16.msra.mxu0 %v229
    %352 = vmatpush.bf16.msra.mxu0 %v227
    %353 = vmatmul.bf16.gmra.mxu0 %v330
    %v354 = vpop.f32.mrf.mxu0
    %v355 = vadd.f32 0.0, %v354
    %v356 = vpop.f32.mrf.mxu0
    %357 = vdwg.mxu0
    %v358 = vadd.f32 %v323, %v342
    %v359 = vadd.f32 %v324, %v355
    %v360 = vxor.u32 %v358, 2147483648
    %v361 = vxor.u32 %v359, 2147483648
    %v362 = vmul.f32 %v360, 1.442695
    %v363 = vpow.pop %v362
    %v364 = vmul.f32 %v361, 1.442695
    %v365 = vpow.pop %v364
    %v366 = vadd.f32 %v363, 1.0
    %v367 = vadd.f32 %v365, 1.0
    %v368 = vrcp.pop %v366
    %v369 = vmul.f32 %v366, %v368
    %v370 = vsub.f32 1.0, %v369
    %v371 = vmul.f32 %v368, %v370
    %v372 = vadd.f32 %v368, %v371
    %vm373 = vweird.f32 %v366
    %vm374 = vweird.f32 %v368
    %vm375 = vmor %vm373, %vm374
    %v376 = vsel %vm375, %v368, %v372
    %v377 = vand.u32 2147483647, %v366
    %vm378 = vcmp.eq.f32.partialorder %v377, 8.507059e+37
    %v379 = vand.u32 %v366, 2147483648
    %v380 = vor.u32 1.1754944e-38, %v379
    %v381 = vsel %vm378, %v380, %v376
    %v382 = vmul.f32 1.0, %v381
    %v383 = vrcp.pop %v367
    %v384 = vmul.f32 %v367, %v383
    %v385 = vsub.f32 1.0, %v384
    %v386 = vmul.f32 %v383, %v385
    %v387 = vadd.f32 %v383, %v386
    %vm388 = vweird.f32 %v367
    %vm389 = vweird.f32 %v383
    %vm390 = vmor %vm388, %vm389
    %v391 = vsel %vm390, %v383, %v387
    %v392 = vand.u32 2147483647, %v367
    %vm393 = vcmp.eq.f32.partialorder %v392, 8.507059e+37
    %v394 = vand.u32 %v367, 2147483648
    %v395 = vor.u32 1.1754944e-38, %v394
    %v396 = vsel %vm393, %v395, %v391
    %v397 = vmul.f32 1.0, %v396
    %v398 = vtanh.pop %v359
    %v399 = vmul.f32 %v382, %v319
    %v400 = vmul.f32 %v382, %v398
    %402 = vrot.lane.b32.xlu0 %v400, 64
    %v403 = vpop.permute.xlu0 %402
    %v405 = vadd.f32 %v399, %v403
    %v406 = vtanh.pop %v405
    %v407 = vmul.f32 %v397, %v406
    %s408 = scalar_lea.vmem [#allocation2], 32
    %v409 = vld [vmem:[%s408] sm:$0xff]
    %v410 = vld [vmem:[%s408 + $0x8] sm:$0xff]
    %v411 = vpack.c.bf16 %v407, %v407
    %413 = vrot.lane.b32.xlu0 %v411, 64
    %v414 = vpop.permute.xlu0 %413
    %v416 = vsel %vm242, %v414, 0
    %418 = vmatpush.bf16.msra.mxu0 0
    %419 = vmatpush.bf16.msra.mxu0 0
    %420 = vmatpush.bf16.msra.mxu0 0
    %421 = vmatpush.bf16.msra.mxu0 0
    %422 = vmatpush.bf16.msra.mxu0 %v232
    %423 = vmatpush.bf16.msra.mxu0 %v230
    %424 = vmatpush.bf16.msra.mxu0 %v228
    %425 = vmatpush.bf16.msra.mxu0 %v226
    %426 = vmatmul.bf16.gmra.mxu0 %v416
    %v427 = vpop.f32.mrf.mxu0
    %v428 = vadd.f32 0.0, %v427
    %v429 = vpop.f32.mrf.mxu0
    %430 = vdwg.mxu0
    %431 = vmatpush.bf16.msra.mxu0 0
    %432 = vmatpush.bf16.msra.mxu0 0
    %433 = vmatpush.bf16.msra.mxu0 0
    %434 = vmatpush.bf16.msra.mxu0 0
    %435 = vmatpush.bf16.msra.mxu0 %v233
    %436 = vmatpush.bf16.msra.mxu0 %v231
    %437 = vmatpush.bf16.msra.mxu0 %v229
    %438 = vmatpush.bf16.msra.mxu0 %v227
    %439 = vmatmul.bf16.gmra.mxu0 %v416
    %v440 = vpop.f32.mrf.mxu0
    %v441 = vadd.f32 0.0, %v440
    %v442 = vpop.f32.mrf.mxu0
    %443 = vdwg.mxu0
    %v444 = vadd.f32 %v409, %v428
    %v445 = vadd.f32 %v410, %v441
    %v446 = vxor.u32 %v444, 2147483648
    %v447 = vxor.u32 %v445, 2147483648
    %v448 = vmul.f32 %v446, 1.442695
    %v449 = vpow.pop %v448
    %v450 = vmul.f32 %v447, 1.442695
    %v451 = vpow.pop %v450
    %v452 = vadd.f32 %v449, 1.0
    %v453 = vadd.f32 %v451, 1.0
    %v454 = vrcp.pop %v452
    %v455 = vmul.f32 %v452, %v454
    %v456 = vsub.f32 1.0, %v455
    %v457 = vmul.f32 %v454, %v456
    %v458 = vadd.f32 %v454, %v457
    %vm459 = vweird.f32 %v452
    %vm460 = vweird.f32 %v454
    %vm461 = vmor %vm459, %vm460
    %v462 = vsel %vm461, %v454, %v458
    %v463 = vand.u32 2147483647, %v452
    %vm464 = vcmp.eq.f32.partialorder %v463, 8.507059e+37
    %v465 = vand.u32 %v452, 2147483648
    %v466 = vor.u32 1.1754944e-38, %v465
    %v467 = vsel %vm464, %v466, %v462
    %v468 = vmul.f32 1.0, %v467
    %v469 = vrcp.pop %v453
    %v470 = vmul.f32 %v453, %v469
    %v471 = vsub.f32 1.0, %v470
    %v472 = vmul.f32 %v469, %v471
    %v473 = vadd.f32 %v469, %v472
    %vm474 = vweird.f32 %v453
    %vm475 = vweird.f32 %v469
    %vm476 = vmor %vm474, %vm475
    %v477 = vsel %vm476, %v469, %v473
    %v478 = vand.u32 2147483647, %v453
    %vm479 = vcmp.eq.f32.partialorder %v478, 8.507059e+37
    %v480 = vand.u32 %v453, 2147483648
    %v481 = vor.u32 1.1754944e-38, %v480
    %v482 = vsel %vm479, %v481, %v477
    %v483 = vmul.f32 1.0, %v482
    %v484 = vtanh.pop %v445
    %v485 = vmul.f32 %v468, %v405
    %v486 = vmul.f32 %v468, %v484
    %488 = vrot.lane.b32.xlu0 %v486, 64
    %v489 = vpop.permute.xlu0 %488
    %v491 = vadd.f32 %v485, %v489
    %v492 = vtanh.pop %v491
    %v493 = vmul.f32 %v483, %v492
    %s494 = scalar_lea.vmem [#allocation2], 48
    %v495 = vld [vmem:[%s494] sm:$0xff]
    %v496 = vld [vmem:[%s494 + $0x8] sm:$0xff]
    %v497 = vpack.c.bf16 %v493, %v493
    %499 = vrot.lane.b32.xlu0 %v497, 64
    %v500 = vpop.permute.xlu0 %499
    %v502 = vsel %vm242, %v500, 0
    %504 = vmatpush.bf16.msra.mxu0 0
    %505 = vmatpush.bf16.msra.mxu0 0
    %506 = vmatpush.bf16.msra.mxu0 0
    %507 = vmatpush.bf16.msra.mxu0 0
    %508 = vmatpush.bf16.msra.mxu0 %v232
    %509 = vmatpush.bf16.msra.mxu0 %v230
    %510 = vmatpush.bf16.msra.mxu0 %v228
    %511 = vmatpush.bf16.msra.mxu0 %v226
    %512 = vmatmul.bf16.gmra.mxu0 %v502
    %v513 = vpop.f32.mrf.mxu0
    %v514 = vadd.f32 0.0, %v513
    %v515 = vpop.f32.mrf.mxu0
    %516 = vdwg.mxu0
    %517 = vmatpush.bf16.msra.mxu0 0
    %518 = vmatpush.bf16.msra.mxu0 0
    %519 = vmatpush.bf16.msra.mxu0 0
    %520 = vmatpush.bf16.msra.mxu0 0
    %521 = vmatpush.bf16.msra.mxu0 %v233
    %522 = vmatpush.bf16.msra.mxu0 %v231
    %523 = vmatpush.bf16.msra.mxu0 %v229
    %524 = vmatpush.bf16.msra.mxu0 %v227
    %525 = vmatmul.bf16.gmra.mxu0 %v502
    %v526 = vpop.f32.mrf.mxu0
    %v527 = vadd.f32 0.0, %v526
    %v528 = vpop.f32.mrf.mxu0
    %529 = vdwg.mxu0
    %v530 = vadd.f32 %v495, %v514
    %v531 = vadd.f32 %v496, %v527
    %v532 = vxor.u32 %v530, 2147483648
    %v533 = vxor.u32 %v531, 2147483648
    %v534 = vmul.f32 %v532, 1.442695
    %v535 = vpow.pop %v534
    %v536 = vmul.f32 %v533, 1.442695
    %v537 = vpow.pop %v536
    %v538 = vadd.f32 %v535, 1.0
    %v539 = vadd.f32 %v537, 1.0
    %v540 = vrcp.pop %v538
    %v541 = vmul.f32 %v538, %v540
    %v542 = vsub.f32 1.0, %v541
    %v543 = vmul.f32 %v540, %v542
    %v544 = vadd.f32 %v540, %v543
    %vm545 = vweird.f32 %v538
    %vm546 = vweird.f32 %v540
    %vm547 = vmor %vm545, %vm546
    %v548 = vsel %vm547, %v540, %v544
    %v549 = vand.u32 2147483647, %v538
    %vm550 = vcmp.eq.f32.partialorder %v549, 8.507059e+37
    %v551 = vand.u32 %v538, 2147483648
    %v552 = vor.u32 1.1754944e-38, %v551
    %v553 = vsel %vm550, %v552, %v548
    %v554 = vmul.f32 1.0, %v553
    %v555 = vrcp.pop %v539
    %v556 = vmul.f32 %v539, %v555
    %v557 = vsub.f32 1.0, %v556
    %v558 = vmul.f32 %v555, %v557
    %v559 = vadd.f32 %v555, %v558
    %vm560 = vweird.f32 %v539
    %vm561 = vweird.f32 %v555
    %vm562 = vmor %vm560, %vm561
    %v563 = vsel %vm562, %v555, %v559
    %v564 = vand.u32 2147483647, %v539
    %vm565 = vcmp.eq.f32.partialorder %v564, 8.507059e+37
    %v566 = vand.u32 %v539, 2147483648
    %v567 = vor.u32 1.1754944e-38, %v566
    %v568 = vsel %vm565, %v567, %v563
    %v569 = vmul.f32 1.0, %v568
    %v570 = vtanh.pop %v531
    %v571 = vmul.f32 %v554, %v491
    %v572 = vmul.f32 %v554, %v570
    %574 = vrot.lane.b32.xlu0 %v572, 64
    %v575 = vpop.permute.xlu0 %574
    %v577 = vadd.f32 %v571, %v575
    %v578 = vtanh.pop %v577
    %v579 = vmul.f32 %v569, %v578
    %s580 = scalar_lea.vmem [#allocation2], 64
    %v581 = vld [vmem:[%s580] sm:$0xff]
    %v582 = vld [vmem:[%s580 + $0x8] sm:$0xff]
    %v583 = vpack.c.bf16 %v579, %v579
    %585 = vrot.lane.b32.xlu0 %v583, 64
    %v586 = vpop.permute.xlu0 %585
    %v588 = vsel %vm242, %v586, 0
    %590 = vmatpush.bf16.msra.mxu0 0
    %591 = vmatpush.bf16.msra.mxu0 0
    %592 = vmatpush.bf16.msra.mxu0 0
    %593 = vmatpush.bf16.msra.mxu0 0
    %594 = vmatpush.bf16.msra.mxu0 %v232
    %595 = vmatpush.bf16.msra.mxu0 %v230
    %596 = vmatpush.bf16.msra.mxu0 %v228
    %597 = vmatpush.bf16.msra.mxu0 %v226
    %598 = vmatmul.bf16.gmra.mxu0 %v588
    %v599 = vpop.f32.mrf.mxu0
    %v600 = vadd.f32 0.0, %v599
    %v601 = vpop.f32.mrf.mxu0
    %602 = vdwg.mxu0
    %603 = vmatpush.bf16.msra.mxu0 0
    %604 = vmatpush.bf16.msra.mxu0 0
    %605 = vmatpush.bf16.msra.mxu0 0
    %606 = vmatpush.bf16.msra.mxu0 0
    %607 = vmatpush.bf16.msra.mxu0 %v233
    %608 = vmatpush.bf16.msra.mxu0 %v231
    %609 = vmatpush.bf16.msra.mxu0 %v229
    %610 = vmatpush.bf16.msra.mxu0 %v227
    %611 = vmatmul.bf16.gmra.mxu0 %v588
    %v612 = vpop.f32.mrf.mxu0
    %v613 = vadd.f32 0.0, %v612
    %v614 = vpop.f32.mrf.mxu0
    %615 = vdwg.mxu0
    %v616 = vadd.f32 %v581, %v600
    %v617 = vadd.f32 %v582, %v613
    %v618 = vxor.u32 %v616, 2147483648
    %v619 = vxor.u32 %v617, 2147483648
    %v620 = vmul.f32 %v618, 1.442695
    %v621 = vpow.pop %v620
    %v622 = vmul.f32 %v619, 1.442695
    %v623 = vpow.pop %v622
    %v624 = vadd.f32 %v621, 1.0
    %v625 = vadd.f32 %v623, 1.0
    %v626 = vrcp.pop %v624
    %v627 = vmul.f32 %v624, %v626
    %v628 = vsub.f32 1.0, %v627
    %v629 = vmul.f32 %v626, %v628
    %v630 = vadd.f32 %v626, %v629
    %vm631 = vweird.f32 %v624
    %vm632 = vweird.f32 %v626
    %vm633 = vmor %vm631, %vm632
    %v634 = vsel %vm633, %v626, %v630
    %v635 = vand.u32 2147483647, %v624
    %vm636 = vcmp.eq.f32.partialorder %v635, 8.507059e+37
    %v637 = vand.u32 %v624, 2147483648
    %v638 = vor.u32 1.1754944e-38, %v637
    %v639 = vsel %vm636, %v638, %v634
    %v640 = vmul.f32 1.0, %v639
    %v641 = vrcp.pop %v625
    %v642 = vmul.f32 %v625, %v641
    %v643 = vsub.f32 1.0, %v642
    %v644 = vmul.f32 %v641, %v643
    %v645 = vadd.f32 %v641, %v644
    %vm646 = vweird.f32 %v625
    %vm647 = vweird.f32 %v641
    %vm648 = vmor %vm646, %vm647
    %v649 = vsel %vm648, %v641, %v645
    %v650 = vand.u32 2147483647, %v625
    %vm651 = vcmp.eq.f32.partialorder %v650, 8.507059e+37
    %v652 = vand.u32 %v625, 2147483648
    %v653 = vor.u32 1.1754944e-38, %v652
    %v654 = vsel %vm651, %v653, %v649
    %v655 = vmul.f32 1.0, %v654
    %v656 = vtanh.pop %v617
    %v657 = vmul.f32 %v640, %v577
    %v658 = vmul.f32 %v640, %v656
    %660 = vrot.lane.b32.xlu0 %v658, 64
    %v661 = vpop.permute.xlu0 %660
    %v663 = vadd.f32 %v657, %v661
    %v664 = vtanh.pop %v663
    %v665 = vmul.f32 %v655, %v664
    %s666 = scalar_lea.vmem [#allocation2], 80
    %v667 = vld [vmem:[%s666] sm:$0xff]
    %v668 = vld [vmem:[%s666 + $0x8] sm:$0xff]
    %v669 = vpack.c.bf16 %v665, %v665
    %671 = vrot.lane.b32.xlu0 %v669, 64
    %v672 = vpop.permute.xlu0 %671
    %v674 = vsel %vm242, %v672, 0
    %676 = vmatpush.bf16.msra.mxu0 0
    %677 = vmatpush.bf16.msra.mxu0 0
    %678 = vmatpush.bf16.msra.mxu0 0
    %679 = vmatpush.bf16.msra.mxu0 0
    %680 = vmatpush.bf16.msra.mxu0 %v232
    %681 = vmatpush.bf16.msra.mxu0 %v230
    %682 = vmatpush.bf16.msra.mxu0 %v228
    %683 = vmatpush.bf16.msra.mxu0 %v226
    %684 = vmatmul.bf16.gmra.mxu0 %v674
    %v685 = vpop.f32.mrf.mxu0
    %v686 = vadd.f32 0.0, %v685
    %v687 = vpop.f32.mrf.mxu0
    %688 = vdwg.mxu0
    %689 = vmatpush.bf16.msra.mxu0 0
    %690 = vmatpush.bf16.msra.mxu0 0
    %691 = vmatpush.bf16.msra.mxu0 0
    %692 = vmatpush.bf16.msra.mxu0 0
    %693 = vmatpush.bf16.msra.mxu0 %v233
    %694 = vmatpush.bf16.msra.mxu0 %v231
    %695 = vmatpush.bf16.msra.mxu0 %v229
    %696 = vmatpush.bf16.msra.mxu0 %v227
    %697 = vmatmul.bf16.gmra.mxu0 %v674
    %v698 = vpop.f32.mrf.mxu0
    %v699 = vadd.f32 0.0, %v698
    %v700 = vpop.f32.mrf.mxu0
    %701 = vdwg.mxu0
    %v702 = vadd.f32 %v667, %v686
    %v703 = vadd.f32 %v668, %v699
    %v704 = vxor.u32 %v702, 2147483648
    %v705 = vxor.u32 %v703, 2147483648
    %v706 = vmul.f32 %v704, 1.442695
    %v707 = vpow.pop %v706
    %v708 = vmul.f32 %v705, 1.442695
    %v709 = vpow.pop %v708
    %v710 = vadd.f32 %v707, 1.0
    %v711 = vadd.f32 %v709, 1.0
    %v712 = vrcp.pop %v710
    %v713 = vmul.f32 %v710, %v712
    %v714 = vsub.f32 1.0, %v713
    %v715 = vmul.f32 %v712, %v714
    %v716 = vadd.f32 %v712, %v715
    %vm717 = vweird.f32 %v710
    %vm718 = vweird.f32 %v712
    %vm719 = vmor %vm717, %vm718
    %v720 = vsel %vm719, %v712, %v716
    %v721 = vand.u32 2147483647, %v710
    %vm722 = vcmp.eq.f32.partialorder %v721, 8.507059e+37
    %v723 = vand.u32 %v710, 2147483648
    %v724 = vor.u32 1.1754944e-38, %v723
    %v725 = vsel %vm722, %v724, %v720
    %v726 = vmul.f32 1.0, %v725
    %v727 = vrcp.pop %v711
    %v728 = vmul.f32 %v711, %v727
    %v729 = vsub.f32 1.0, %v728
    %v730 = vmul.f32 %v727, %v729
    %v731 = vadd.f32 %v727, %v730
    %vm732 = vweird.f32 %v711
    %vm733 = vweird.f32 %v727
    %vm734 = vmor %vm732, %vm733
    %v735 = vsel %vm734, %v727, %v731
    %v736 = vand.u32 2147483647, %v711
    %vm737 = vcmp.eq.f32.partialorder %v736, 8.507059e+37
    %v738 = vand.u32 %v711, 2147483648
    %v739 = vor.u32 1.1754944e-38, %v738
    %v740 = vsel %vm737, %v739, %v735
    %v741 = vmul.f32 1.0, %v740
    %v742 = vtanh.pop %v703
    %v743 = vmul.f32 %v726, %v663
    %v744 = vmul.f32 %v726, %v742
    %746 = vrot.lane.b32.xlu0 %v744, 64
    %v747 = vpop.permute.xlu0 %746
    %v749 = vadd.f32 %v743, %v747
    %v750 = vtanh.pop %v749
    %v751 = vmul.f32 %v741, %v750
    %s752 = scalar_lea.vmem [#allocation2], 96
    %v753 = vld [vmem:[%s752] sm:$0xff]
    %v754 = vld [vmem:[%s752 + $0x8] sm:$0xff]
    %v755 = vpack.c.bf16 %v751, %v751
    %757 = vrot.lane.b32.xlu0 %v755, 64
    %v758 = vpop.permute.xlu0 %757
    %v760 = vsel %vm242, %v758, 0
    %762 = vmatpush.bf16.msra.mxu0 0
    %763 = vmatpush.bf16.msra.mxu0 0
    %764 = vmatpush.bf16.msra.mxu0 0
    %765 = vmatpush.bf16.msra.mxu0 0
    %766 = vmatpush.bf16.msra.mxu0 %v232
    %767 = vmatpush.bf16.msra.mxu0 %v230
    %768 = vmatpush.bf16.msra.mxu0 %v228
    %769 = vmatpush.bf16.msra.mxu0 %v226
    %770 = vmatmul.bf16.gmra.mxu0 %v760
    %v771 = vpop.f32.mrf.mxu0
    %v772 = vadd.f32 0.0, %v771
    %v773 = vpop.f32.mrf.mxu0
    %774 = vdwg.mxu0
    %775 = vmatpush.bf16.msra.mxu0 0
    %776 = vmatpush.bf16.msra.mxu0 0
    %777 = vmatpush.bf16.msra.mxu0 0
    %778 = vmatpush.bf16.msra.mxu0 0
    %779 = vmatpush.bf16.msra.mxu0 %v233
    %780 = vmatpush.bf16.msra.mxu0 %v231
    %781 = vmatpush.bf16.msra.mxu0 %v229
    %782 = vmatpush.bf16.msra.mxu0 %v227
    %783 = vmatmul.bf16.gmra.mxu0 %v760
    %v784 = vpop.f32.mrf.mxu0
    %v785 = vadd.f32 0.0, %v784
    %v786 = vpop.f32.mrf.mxu0
    %787 = vdwg.mxu0
    %v788 = vadd.f32 %v753, %v772
    %v789 = vadd.f32 %v754, %v785
    %v790 = vxor.u32 %v788, 2147483648
    %v791 = vxor.u32 %v789, 2147483648
    %v792 = vmul.f32 %v790, 1.442695
    %v793 = vpow.pop %v792
    %v794 = vmul.f32 %v791, 1.442695
    %v795 = vpow.pop %v794
    %v796 = vadd.f32 %v793, 1.0
    %v797 = vadd.f32 %v795, 1.0
    %v798 = vrcp.pop %v796
    %v799 = vmul.f32 %v796, %v798
    %v800 = vsub.f32 1.0, %v799
    %v801 = vmul.f32 %v798, %v800
    %v802 = vadd.f32 %v798, %v801
    %vm803 = vweird.f32 %v796
    %vm804 = vweird.f32 %v798
    %vm805 = vmor %vm803, %vm804
    %v806 = vsel %vm805, %v798, %v802
    %v807 = vand.u32 2147483647, %v796
    %vm808 = vcmp.eq.f32.partialorder %v807, 8.507059e+37
    %v809 = vand.u32 %v796, 2147483648
    %v810 = vor.u32 1.1754944e-38, %v809
    %v811 = vsel %vm808, %v810, %v806
    %v812 = vmul.f32 1.0, %v811
    %v813 = vrcp.pop %v797
    %v814 = vmul.f32 %v797, %v813
    %v815 = vsub.f32 1.0, %v814
    %v816 = vmul.f32 %v813, %v815
    %v817 = vadd.f32 %v813, %v816
    %vm818 = vweird.f32 %v797
    %vm819 = vweird.f32 %v813
    %vm820 = vmor %vm818, %vm819
    %v821 = vsel %vm820, %v813, %v817
    %v822 = vand.u32 2147483647, %v797
    %vm823 = vcmp.eq.f32.partialorder %v822, 8.507059e+37
    %v824 = vand.u32 %v797, 2147483648
    %v825 = vor.u32 1.1754944e-38, %v824
    %v826 = vsel %vm823, %v825, %v821
    %v827 = vmul.f32 1.0, %v826
    %v828 = vtanh.pop %v789
    %v829 = vmul.f32 %v812, %v749
    %v830 = vmul.f32 %v812, %v828
    %832 = vrot.lane.b32.xlu0 %v830, 64
    %v833 = vpop.permute.xlu0 %832
    %v835 = vadd.f32 %v829, %v833
    %v836 = vtanh.pop %v835
    %v837 = vmul.f32 %v827, %v836
    %s838 = scalar_lea.vmem [#allocation2], 112
    %v839 = vld [vmem:[%s838] sm:$0xff]
    %v840 = vld [vmem:[%s838 + $0x8] sm:$0xff]
    %v841 = vpack.c.bf16 %v837, %v837
    %843 = vrot.lane.b32.xlu0 %v841, 64
    %v844 = vpop.permute.xlu0 %843
    %v846 = vsel %vm242, %v844, 0
    %848 = vmatpush.bf16.msra.mxu0 0
    %849 = vmatpush.bf16.msra.mxu0 0
    %850 = vmatpush.bf16.msra.mxu0 0
    %851 = vmatpush.bf16.msra.mxu0 0
    %852 = vmatpush.bf16.msra.mxu0 %v232
    %853 = vmatpush.bf16.msra.mxu0 %v230
    %854 = vmatpush.bf16.msra.mxu0 %v228
    %855 = vmatpush.bf16.msra.mxu0 %v226
    %856 = vmatmul.bf16.gmra.mxu0 %v846
    %v857 = vpop.f32.mrf.mxu0
    %v858 = vadd.f32 0.0, %v857
    %v859 = vpop.f32.mrf.mxu0
    %860 = vdwg.mxu0
    %861 = vmatpush.bf16.msra.mxu0 0
    %862 = vmatpush.bf16.msra.mxu0 0
    %863 = vmatpush.bf16.msra.mxu0 0
    %864 = vmatpush.bf16.msra.mxu0 0
    %865 = vmatpush.bf16.msra.mxu0 %v233
    %866 = vmatpush.bf16.msra.mxu0 %v231
    %867 = vmatpush.bf16.msra.mxu0 %v229
    %868 = vmatpush.bf16.msra.mxu0 %v227
    %869 = vmatmul.bf16.gmra.mxu0 %v846
    %v870 = vpop.f32.mrf.mxu0
    %v871 = vadd.f32 0.0, %v870
    %v872 = vpop.f32.mrf.mxu0
    %873 = vdwg.mxu0
    %v874 = vadd.f32 %v839, %v858
    %v875 = vadd.f32 %v840, %v871
    %v876 = vxor.u32 %v874, 2147483648
    %v877 = vxor.u32 %v875, 2147483648
    %v878 = vmul.f32 %v876, 1.442695
    %v879 = vpow.pop %v878
    %v880 = vmul.f32 %v877, 1.442695
    %v881 = vpow.pop %v880
    %v882 = vadd.f32 %v879, 1.0
    %v883 = vadd.f32 %v881, 1.0
    %v884 = vrcp.pop %v882
    %v885 = vmul.f32 %v882, %v884
    %v886 = vsub.f32 1.0, %v885
    %v887 = vmul.f32 %v884, %v886
    %v888 = vadd.f32 %v884, %v887
    %vm889 = vweird.f32 %v882
    %vm890 = vweird.f32 %v884
    %vm891 = vmor %vm889, %vm890
    %v892 = vsel %vm891, %v884, %v888
    %v893 = vand.u32 2147483647, %v882
    %vm894 = vcmp.eq.f32.partialorder %v893, 8.507059e+37
    %v895 = vand.u32 %v882, 2147483648
    %v896 = vor.u32 1.1754944e-38, %v895
    %v897 = vsel %vm894, %v896, %v892
    %v898 = vmul.f32 1.0, %v897
    %v899 = vrcp.pop %v883
    %v900 = vmul.f32 %v883, %v899
    %v901 = vsub.f32 1.0, %v900
    %v902 = vmul.f32 %v899, %v901
    %v903 = vadd.f32 %v899, %v902
    %vm904 = vweird.f32 %v883
    %vm905 = vweird.f32 %v899
    %vm906 = vmor %vm904, %vm905
    %v907 = vsel %vm906, %v899, %v903
    %v908 = vand.u32 2147483647, %v883
    %vm909 = vcmp.eq.f32.partialorder %v908, 8.507059e+37
    %v910 = vand.u32 %v883, 2147483648
    %v911 = vor.u32 1.1754944e-38, %v910
    %v912 = vsel %vm909, %v911, %v907
    %v913 = vmul.f32 1.0, %v912
    %v914 = vtanh.pop %v875
    %v915 = vmul.f32 %v898, %v835
    %v916 = vmul.f32 %v898, %v914
    %918 = vrot.lane.b32.xlu0 %v916, 64
    %v919 = vpop.permute.xlu0 %918
    %v921 = vadd.f32 %v915, %v919
    %v922 = vtanh.pop %v921
    %v923 = vmul.f32 %v913, %v922
    %v924 = vld [vmem:[#allocation3] sm:$0xff]
    %v925 = vld [vmem:[#allocation3 + $0x8] sm:$0xff]
    %v926 = vld [vmem:[#allocation3 + $0x10] sm:$0xff]
    %v927 = vld [vmem:[#allocation3 + $0x18] sm:$0xff]
    %v928 = vld [vmem:[#allocation3 + $0x20] sm:$0xff]
    %v929 = vld [vmem:[#allocation3 + $0x28] sm:$0xff]
    %v930 = vld [vmem:[#allocation3 + $0x30] sm:$0xff]
    %v931 = vld [vmem:[#allocation3 + $0x38] sm:$0xff]
    %v932 = vld [vmem:[%s5] sm:$0x1]
    %v934 = vperm.slane %v932, 0
    %937 = vrot.lane.b32.xlu0 %v923, 64
    %v938 = vpop.permute.xlu0 %937
    %v939 = vsel %vm242, %v938, 0
    %941 = vmatpush.msra.mxu0 0.0
    %942 = vmatpush.msra.mxu0 0.0
    %943 = vmatpush.msra.mxu0 0.0
    %944 = vmatpush.msra.mxu0 0.0
    %945 = vmatpush.msra.mxu0 0.0
    %946 = vmatpush.msra.mxu0 0.0
    %947 = vmatpush.msra.mxu0 0.0
    %948 = vmatpush.msra.mxu0 0.0
    %949 = vmatpush.msra.mxu0 %v931
    %950 = vmatpush.msra.mxu0 %v930
    %951 = vmatpush.msra.mxu0 %v929
    %952 = vmatpush.msra.mxu0 %v928
    %953 = vmatpush.msra.mxu0 %v927
    %954 = vmatpush.msra.mxu0 %v926
    %955 = vmatpush.msra.mxu0 %v925
    %956 = vmatpush.msra.mxu0 %v924
    %957 = vmatmul.f32.gmra.mxu0 %v939
    %v958 = vpop.f32.mrf.mxu0
    %v959 = vadd.f32 %v934, %v958
    %960 = vdwg.mxu0
    %961 = vst [vmem:[%s6] sm:$0xff] %v959
    // Predicated region
    $region30: #{rnn_forward.1} parent=1 // pred_check
      _
    $region31: #{rnn_forward.1} parent=1 // pred_check_branch
      %963 = sbr.rel (0) target = $region33
    $region32: #{rnn_forward.1} parent=1 // pred_region
      _
    $region33: #{rnn_forward.1} parent=1 // pred_fallthru
      _
    // Predicated region
    $region34: #{rnn_forward.1} parent=1 // pred_check
      _
    $region35: #{rnn_forward.1} parent=1 // pred_check_branch
      %965 = sbr.rel (0) target = $region37
    $region36: #{rnn_forward.1} parent=1 // pred_region
      _
    $region37: #{rnn_forward.1} parent=1 // pred_fallthru
      _
    %966 = vsyncpa [#allocation4], 1

</llo_original>
